<compile_context>
chip_gen: v7x
topology: tpu7x:2x2x1
jax: 0.10.0
libtpu: 0.0.40
codegen_flags: <defaults>
</compile_context>

<pallas_src>
import functools
import math

import jax
import jax.numpy as jnp
from jax import lax
from jax.experimental import pallas as pl
from jax.experimental.pallas import tpu as pltpu

LANES = 128
SUBLANES = 8


def _chip_kind() -> str:
    try:
        return jax.devices()[0].device_kind.lower()
    except Exception:
        return ""


def _default_block_bytes(kind: str) -> int:
    # ~4 MiB input blocks on v6e/v7x (32 MiB scoped-VMEM default headroom);
    # ~2 MiB on v5e / unknown chips (16 MiB scoped default).  Two inputs x two
    # pipeline buffers => 16 MiB / 8 MiB of input buffering respectively.
    if ("v6" in kind) or ("v7" in kind):
        return 4 * 1024 * 1024
    return 2 * 1024 * 1024


def _default_num_splits(kind: str) -> int:
    # Only v7x has 2 TensorCores per chip; a leading "parallel" axis on
    # single-TC v5e/v6e is just a serial loop plus clamp/phantom overhead.
    return 2 if "v7" in kind else 1


def _mse_partial_kernel(a_ref, b_ref, o_ref, *, row_tile, rows_valid,
                        tiles_total, tiles_per_split, num_splits,
                        ragged, has_phantom):
    if num_splits == 1:
        i = pl.program_id(0)
        t = i
    else:
        c = pl.program_id(0)            # core split (parallel)
        i = pl.program_id(1)            # row-tile within split (reduction)
        t = c * tiles_per_split + i     # unclamped tile index

    @pl.when(i == 0)
    def _init():
        o_ref[...] = jnp.zeros_like(o_ref)

    def _accumulate(mask_rows):
        # Inputs stay in native dtype in HBM; cast per-tile in VMEM.
        d = a_ref[...].astype(jnp.float32) - b_ref[...].astype(jnp.float32)
        sq = d * d
        if mask_rows:
            # Final (partial) tile only: rows beyond rows_valid hold
            # unspecified garbage (possibly NaN/Inf) -> must be a select
            # (jnp.where), never a multiply-by-mask.
            row0 = t * row_tile
            rid = lax.broadcasted_iota(jnp.int32, sq.shape, 0) + row0
            sq = jnp.where(rid < rows_valid, sq, 0.0)
        # (row_tile, 128) -> (8, 128) with pure-VPU elementwise adds; the one
        # expensive cross-lane reduction happens once, in the wrapper.
        o_ref[...] += sq.reshape(row_tile // SUBLANES, SUBLANES, LANES).sum(axis=0)

    if ragged:
        # Keep the iota/where mask off the hot tiles; phantom tiles
        # (t >= tiles_total, v7x split only) fall through both branches.
        pl.when(t == tiles_total - 1)(lambda: _accumulate(True))
        if tiles_total > 1:
            pl.when(t < tiles_total - 1)(lambda: _accumulate(False))
    elif has_phantom:
        pl.when(t < tiles_total)(lambda: _accumulate(False))
    else:
        _accumulate(False)


def mse_pallas(A, B, *, target_block_bytes=None, num_splits=None):
    """mean((A/255 - B/255)^2) over all elements, computed on TPU via Pallas."""
    assert A.shape == B.shape, "MSELoss requires matching shapes"
    n_elem = math.prod(A.shape)
    assert n_elem > 0
    scale = 1.0 / (255.0 * 255.0 * float(n_elem))

    kind = _chip_kind()
    if target_block_bytes is None:
        target_block_bytes = _default_block_bytes(kind)
    if num_splits is None:
        num_splits = _default_num_splits(kind)

    a_flat = jnp.ravel(A)
    b_flat = jnp.ravel(B)

    # Split off the <128-element lane tail so the body reshapes to (rows, 128)
    # without a padding pass.  For n % 128 == 0 (typical image batches) the
    # reshape is a pure metadata view: zero extra HBM traffic.
    lane_rem = n_elem % LANES
    body_elems = n_elem - lane_rem

    tail_sum = jnp.float32(0.0)
    if lane_rem:
        ta = a_flat[body_elems:].astype(jnp.float32)
        tb = b_flat[body_elems:].astype(jnp.float32)
        td = ta - tb
        tail_sum = jnp.sum(td * td)

    rows = body_elems // LANES
    if rows < SUBLANES:
        # Tiny input (<1 KiB of body): a kernel launch is pure overhead.
        if body_elems:
            ba = a_flat[:body_elems].astype(jnp.float32)
            bb = b_flat[:body_elems].astype(jnp.float32)
            bd = ba - bb
            tail_sum = tail_sum + jnp.sum(bd * bd)
        return tail_sum * scale

    # Note: when lane_rem != 0 this prefix slice may materialize one copy of
    # the body (comparable to the old pad); when lane_rem == 0 it's a no-op.
    a2 = a_flat[:body_elems].reshape(rows, LANES)
    b2 = b_flat[:body_elems].reshape(rows, LANES)

    itemsize = jnp.dtype(A.dtype).itemsize
    # Byte-targeted row tile: multiple of 8 sublanes, <= rows.
    target_rows = max(SUBLANES,
                      (target_block_bytes // (LANES * itemsize))
                      // SUBLANES * SUBLANES)
    row_tile = min(target_rows, (rows // SUBLANES) * SUBLANES)
    tiles_total = pl.cdiv(rows, row_tile)
    ragged = (rows % row_tile) != 0

    if num_splits < 2 or tiles_total < 2:
        num_splits = 1
    tiles_per_split = pl.cdiv(tiles_total, num_splits)
    has_phantom = num_splits * tiles_per_split > tiles_total

    if num_splits == 1:
        grid = (tiles_total,)
        dim_sem = ("arbitrary",)
        in_index_map = lambda i: (i, 0)
        out_index_map = lambda i: (0, 0, 0)
    else:
        grid = (num_splits, tiles_per_split)
        dim_sem = ("parallel", "arbitrary")

        def in_index_map(c, i):
            t = c * tiles_per_split + i
            if has_phantom:
                # Clamped phantom tile re-uses the previous block index, so the
                # pipeline elides its DMA; the kernel skips its accumulate.
                t = jnp.minimum(t, tiles_total - 1)
            return (t, 0)

        out_index_map = lambda c, i: (c, 0, 0)

    kernel = functools.partial(
        _mse_partial_kernel,
        row_tile=row_tile, rows_valid=rows, tiles_total=tiles_total,
        tiles_per_split=tiles_per_split, num_splits=num_splits,
        ragged=ragged, has_phantom=has_phantom)

    cost = pl.CostEstimate(
        flops=3 * body_elems,
        transcendentals=0,
        bytes_accessed=2 * body_elems * itemsize
        + num_splits * SUBLANES * LANES * 4)

    partials = pl.pallas_call(
        kernel,
        out_shape=jax.ShapeDtypeStruct((num_splits, SUBLANES, LANES),
                                       jnp.float32),
        grid_spec=pltpu.PrefetchScalarGridSpec(
            num_scalar_prefetch=0,
            grid=grid,
            in_specs=[
                pl.BlockSpec((row_tile, LANES), in_index_map),
                pl.BlockSpec((row_tile, LANES), in_index_map),
            ],
            out_specs=pl.BlockSpec((None, SUBLANES, LANES), out_index_map),
        ),
        compiler_params=pltpu.CompilerParams(
            dimension_semantics=dim_sem,
            vmem_limit_bytes=40 * 1024 * 1024,
        ),
        cost_estimate=cost,
    )(a2, b2)

    # One cross-lane reduce + fold the 1/255 scaling into a single final scalar.
    # TODO(synk): for >~1e9-element inputs consider an f64 final sum here.
    return (jnp.sum(partials) + tail_sum) * scale


def _reference(A, B):
    return jnp.mean((A / 255.0 - B / 255.0) ** 2)


def _check(shape, k1, k2, tol, **kw):
    A = jax.random.uniform(k1, shape, jnp.float32, 0.0, 255.0)
    B = jax.random.uniform(k2, shape, jnp.float32, 0.0, 255.0)
    out = jax.block_until_ready(mse_pallas(A, B, **kw))
    ref = _reference(A, B)
    assert jnp.allclose(out, ref, rtol=tol, atol=1e-8), (
        shape, kw, float(out), float(ref))
    return out


if __name__ == "__main__":
    key = jax.random.PRNGKey(0)
    ks = jax.random.split(key, 6)

    # Primary small image-like input (NCHW, pixel-scale values): default config.
    _check((2, 4, 16, 16), ks[0], ks[1], tol=1e-5)

    # Lane-misaligned size: exercises the plain-jnp tail path (no padding pass).
    _check((3, 5, 7, 11), ks[2], ks[3], tol=1e-5)

    # Multi-tile + ragged last tile + 2-way split / clamped-phantom machinery,
    # forced via a small block size so the smoke test stays small and fast.
    _check((2, 3, 224, 224), ks[4], ks[5], tol=5e-5,
           target_block_bytes=64 * 1024, num_splits=2)

    print("KERNEL_OK")
</pallas_src>

<mosaic_0001>
module attributes {stable_mosaic.version = 11 : i64} {
  func.func @_mse_partial_kernel(%arg0: i32, %arg1: memref<16x128xf32, #tpu.memory_space<vmem>>, %arg2: memref<16x128xf32, #tpu.memory_space<vmem>>, %arg3: memref<1x8x128xf32, #tpu.memory_space<vmem>>) attributes {dimension_semantics = [#tpu.dimension_semantics<arbitrary>], iteration_bounds = array<i64: 1>, scalar_prefetch = 0 : i64, scratch_operands = 0 : i64, tpu.core_type = #tpu.core_type<tc>, window_params = [{transform_indices = @transform_0, window_bounds = array<i64: 16, 128>}, {transform_indices = @transform_1, window_bounds = array<i64: 16, 128>}, {pipeline_mode = #tpu.pipeline_mode<synchronous>, transform_indices = @transform_2, window_bounds = array<i64: 1, 8, 128>}]} {
    %c0_i32 = arith.constant 0 : i32
    %0 = arith.cmpi eq, %arg0, %c0_i32 : i32
    %1 = arith.extui %0 : i1 to i32
    %c0_i32_0 = arith.constant 0 : i32
    %2 = arith.cmpi ne, %1, %c0_i32_0 : i32
    scf.if %2 {
      %cst_10 = arith.constant 0.000000e+00 : f32
      %15 = vector.broadcast %cst_10 : f32 to vector<8x128xf32>
      %c0_11 = arith.constant 0 : index
      %c0_12 = arith.constant 0 : index
      %c0_13 = arith.constant 0 : index
      %16 = vector.load %arg3[%c0_11, %c0_12, %c0_13] : memref<1x8x128xf32, #tpu.memory_space<vmem>>, vector<1x8x128xf32>
      %17 = vector.shape_cast %16 : vector<1x8x128xf32> to vector<8x128xf32>
      %18 = vector.shape_cast %15 : vector<8x128xf32> to vector<1x8x128xf32>
      tpu.vector_store %arg3[%c0_11, %c0_12, %c0_13], %18 {strides = array<i32>} : memref<1x8x128xf32, #tpu.memory_space<vmem>>, vector<1x8x128xf32>,
    } else {
    }
    %c0 = arith.constant 0 : index
    %c0_1 = arith.constant 0 : index
    %3 = vector.load %arg1[%c0, %c0_1] : memref<16x128xf32, #tpu.memory_space<vmem>>, vector<16x128xf32>
    %c0_2 = arith.constant 0 : index
    %c0_3 = arith.constant 0 : index
    %4 = vector.load %arg2[%c0_2, %c0_3] : memref<16x128xf32, #tpu.memory_space<vmem>>, vector<16x128xf32>
    %5 = arith.subf %3, %4 : vector<16x128xf32>
    %6 = arith.mulf %5, %5 : vector<16x128xf32>
    %c0_4 = arith.constant 0 : index
    %c0_5 = arith.constant 0 : index
    %c0_6 = arith.constant 0 : index
    %7 = vector.load %arg3[%c0_4, %c0_5, %c0_6] : memref<1x8x128xf32, #tpu.memory_space<vmem>>, vector<1x8x128xf32>
    %8 = vector.shape_cast %7 : vector<1x8x128xf32> to vector<8x128xf32>
    %9 = vector.shape_cast %6 : vector<16x128xf32> to vector<2x8x128xf32>
    %cst = arith.constant dense<0.000000e+00> : vector<8x128xf32>
    %10 = vector.multi_reduction <add>, %9, %cst [0] : vector<2x8x128xf32> to vector<8x128xf32>
    %11 = arith.addf %8, %10 : vector<8x128xf32>
    %c0_7 = arith.constant 0 : index
    %c0_8 = arith.constant 0 : index
    %c0_9 = arith.constant 0 : index
    %12 = vector.load %arg3[%c0_7, %c0_8, %c0_9] : memref<1x8x128xf32, #tpu.memory_space<vmem>>, vector<1x8x128xf32>
    %13 = vector.shape_cast %12 : vector<1x8x128xf32> to vector<8x128xf32>
    %14 = vector.shape_cast %11 : vector<8x128xf32> to vector<1x8x128xf32>
    tpu.vector_store %arg3[%c0_7, %c0_8, %c0_9], %14 {strides = array<i32>} : memref<1x8x128xf32, #tpu.memory_space<vmem>>, vector<1x8x128xf32>,
    return
  }
  func.func @transform_0(%arg0: i32) -> (i32, i32) {
    %c0_i32 = arith.constant 0 : i32
    %c0_i32_0 = arith.constant 0 : i32
    return %arg0, %c0_i32 : i32, i32
  }
  func.func @transform_1(%arg0: i32) -> (i32, i32) {
    %c0_i32 = arith.constant 0 : i32
    %c0_i32_0 = arith.constant 0 : i32
    return %arg0, %c0_i32 : i32, i32
  }
  func.func @transform_2(%arg0: i32) -> (i32, i32, i32) {
    %c0_i32 = arith.constant 0 : i32
    %c0_i32_0 = arith.constant 0 : i32
    %c0_i32_1 = arith.constant 0 : i32
    %c0_i32_2 = arith.constant 0 : i32
    return %c0_i32, %c0_i32_0, %c0_i32_1 : i32, i32, i32
  }
}

</mosaic_0001>

<llo_original>
// kernel: tpu_custom_call.1
$region0: #{tpu_custom_call.1}
  #allocation0 [shape = 'u32[]', space=smem, size = 0x4, offset = 0x4, fixed_abs, tag = 'smem constant byte address 0x4 - core index']
  #allocation1 [shape = 'u32[144,128]{1,0:T(1,128)}', space=vmem, size = 0x12000, scoped, tag = 'internal scratch']
  %s0 = inlined_call_operand.hbm [shape: f32[16,128], index: 0, kind: input, shape index: {}]
  %s1 = inlined_call_operand.hbm [shape: f32[16,128], index: 1, kind: input, shape index: {}]
  %s2 = inlined_call_operand.hbm [shape: f32[1,8,128], index: 2, kind: output, shape index: {}]
  %s3 = sld [smem:[#allocation0]]
  $region30: #{tpu_custom_call.1} parent=0
    _
  %s5 = ssub.s32 1, %s3
  %s6 = scalar_select 0, %s5, %s3
  $region1: #{tpu_custom_call.1} parent=0
    #allocation2 [shape = 'u8[8192]{0}', space=vmem, size = 0x2000, scoped, tag = 'input window, operand 0, single buffered']
    #allocation3 [shape = 's32[1]{0}', space=sflag, size = 0x4, scoped, tag = 'scoped memory for tpu_custom_call.1']
    #allocation4 [shape = 's32[1]{0}', space=sflag, size = 0x4, scoped, tag = 'scoped memory for tpu_custom_call.1']
    #allocation5 [shape = 'u8[8192]{0}', space=vmem, size = 0x2000, scoped, tag = 'input window, operand 1, single buffered']
    #allocation6 [shape = 's32[1]{0}', space=sflag, size = 0x4, scoped, tag = 'scoped memory for tpu_custom_call.1']
    #allocation7 [shape = 'u8[4096]{0}', space=vmem, size = 0x1000, scoped, tag = 'output window, operand 0, single buffered']
    %7 = vsyncpa [#allocation3], 0
    %8 = vsyncpa [#allocation6], 0
    %9 = vsyncpa [#allocation4], 0
    // Predicated region
    $region2: #{tpu_custom_call.1} parent=1 // pred_check
      _
    $region3: #{tpu_custom_call.1} parent=1 // pred_check_branch
      %11 = sbr.rel (0) target = $region5
    $region4: #{tpu_custom_call.1} parent=1 // pred_region
      %s13 = ssub.s32 256, 256
      %14 = vsyncadd [#allocation3], %s13
      %s15 = sshll.u32 [#allocation2], 4
      %s16 = int_to_ptr.vmem [resolvable:$true] %s15
      %21 = dma.hbm_to_vmem [thread:$0]  %s0, 256, %s16, [#allocation3], 128, 128, 8
    $region5: #{tpu_custom_call.1} parent=1 // pred_fallthru
      _
    // Predicated region
    $region6: #{tpu_custom_call.1} parent=1 // pred_check
      _
    $region7: #{tpu_custom_call.1} parent=1 // pred_check_branch
      %23 = sbr.rel (0) target = $region9
    $region8: #{tpu_custom_call.1} parent=1 // pred_region
      %s25 = ssub.s32 256, 256
      %26 = vsyncadd [#allocation6], %s25
      %s27 = sshll.u32 [#allocation5], 4
      %s28 = int_to_ptr.vmem [resolvable:$true] %s27
      %33 = dma.hbm_to_vmem [thread:$0]  %s1, 256, %s28, [#allocation6], 128, 128, 8
    $region9: #{tpu_custom_call.1} parent=1 // pred_fallthru
      _
    // Predicated region
    $region10: #{tpu_custom_call.1} parent=1 // pred_check
      _
    $region11: #{tpu_custom_call.1} parent=1 // pred_check_branch
      %35 = sbr.rel (0) target = $region13
    $region12: #{tpu_custom_call.1} parent=1 // pred_region
      %36 = dma.done [#allocation3], 256
    $region13: #{tpu_custom_call.1} parent=1 // pred_fallthru
      _
    // Predicated region
    $region14: #{tpu_custom_call.1} parent=1 // pred_check
      _
    $region15: #{tpu_custom_call.1} parent=1 // pred_check_branch
      %38 = sbr.rel (0) target = $region17
    $region16: #{tpu_custom_call.1} parent=1 // pred_region
      %39 = dma.done [#allocation6], 256
    $region17: #{tpu_custom_call.1} parent=1 // pred_fallthru
      _
    %p40 = scmp.eq.s32.totalorder 0, 0
    // Predicated region
    $region18: #{tpu_custom_call.1} parent=1 // pred_check
      %p41 = pneg %p40
    $region19: #{tpu_custom_call.1} parent=1 // pred_check_branch
      %43 = sbr.rel (%p41) target = $region21
    $region20: #{tpu_custom_call.1} parent=1 // pred_region
      %44 = vst [vmem:[#allocation7] sm:$0xff] 0.0
    $region21: #{tpu_custom_call.1} parent=1 // pred_fallthru
      _
    %v45 = vld [vmem:[#allocation2] sm:$0xff]
    %v46 = vld [vmem:[#allocation2 + $0x8] sm:$0xff]
    %v47 = vld [vmem:[#allocation5] sm:$0xff]
    %v48 = vld [vmem:[#allocation5 + $0x8] sm:$0xff]
    %v49 = vsub.f32 %v45, %v47
    %v50 = vsub.f32 %v46, %v48
    %v51 = vmul.f32 %v49, %v49
    %v52 = vmul.f32 %v50, %v50
    %v53 = vld [vmem:[#allocation7] sm:$0xff]
    %v54 = vadd.f32 %v51, %v52
    %v55 = vadd.f32 %v53, %v54
    %56 = vst [vmem:[#allocation7] sm:$0xff] %v55
    // Predicated region
    $region22: #{tpu_custom_call.1} parent=1 // pred_check
      _
    $region23: #{tpu_custom_call.1} parent=1 // pred_check_branch
      %58 = sbr.rel (0) target = $region25
    $region24: #{tpu_custom_call.1} parent=1 // pred_region
      %s60 = ssub.s32 128, 128
      %61 = vsyncadd [#allocation4], %s60
      %s63 = sshll.u32 [#allocation7], 4
      %s64 = int_to_ptr.vmem [resolvable:$true] %s63
      %66 = dma.vmem_to_hbm [thread:$0]  %s64, 128, %s2, [#allocation4]
    $region25: #{tpu_custom_call.1} parent=1 // pred_fallthru
      _
    // Predicated region
    $region26: #{tpu_custom_call.1} parent=1 // pred_check
      _
    $region27: #{tpu_custom_call.1} parent=1 // pred_check_branch
      %68 = sbr.rel (0) target = $region29
    $region28: #{tpu_custom_call.1} parent=1 // pred_region
      %69 = dma.done [#allocation4], 128
    $region29: #{tpu_custom_call.1} parent=1 // pred_fallthru
      _
    %70 = vsyncpa [#allocation3], 1
    %71 = vsyncpa [#allocation6], 1
    %72 = vsyncpa [#allocation4], 1

</llo_original>
